<compile_context>
chip_gen: v7x
topology: tpu7x:2x2x1
jax: 0.10.0
libtpu: 0.0.40
codegen_flags: <defaults>
</compile_context>

<pallas_src>
import functools

import jax
import jax.numpy as jnp
from jax.experimental import pallas as pl
from jax.experimental.pallas import tpu as pltpu


# ---------------------------------------------------------------------------
# shared in-kernel math (pure jnp; identical on TPU and fallback paths)
# ---------------------------------------------------------------------------

def _onehot_first_argmax(vals, C):
    """One-hot of argmax along last dim; first index wins on ties (torch argmax)."""
    col = jax.lax.broadcasted_iota(jnp.int32, vals.shape, dimension=vals.ndim - 1)
    mx = jnp.max(vals, axis=-1, keepdims=True)
    first = jnp.min(jnp.where(vals == mx, col, C), axis=-1, keepdims=True)
    return (col == first).astype(jnp.float32)


def _train_math(x_f32, g_f32, tau, hard):
    """gumbel_softmax forward value given logits x and Gumbel noise g."""
    logits = x_f32 + g_f32
    if hard:
        # argmax is invariant under /tau and softmax; skip exp/sum/divide.
        return _onehot_first_argmax(logits, x_f32.shape[-1])
    z = logits * jnp.float32(1.0 / tau)
    z = z - jnp.max(z, axis=-1, keepdims=True)
    e = jnp.exp(z)
    s = jnp.sum(e, axis=-1, keepdims=True)
    return e / s  # exact divide (parity with torch softmax)


def _uniform_from_bits(shape):
    """Uniform [tiny, 1) from the on-chip PRNG (mantissa trick). TPU only."""
    bits = pltpu.prng_random_bits(shape)
    if bits.dtype != jnp.uint32:
        bits = pltpu.bitcast(bits, jnp.uint32)
    # 23 random mantissa bits + exponent of 1.0 -> float in [1, 2), minus 1.
    f = pltpu.bitcast((bits >> 9) | jnp.uint32(0x3F800000), jnp.float32) - 1.0
    return jnp.maximum(f, jnp.float32(jnp.finfo(jnp.float32).tiny))


# ---------------------------------------------------------------------------
# kernels
# ---------------------------------------------------------------------------

def _train_kernel_tpu(seed_ref, x_ref, o_ref, *, tau, hard):
    """training=True, TPU backend: Gumbel noise generated on-chip."""
    pltpu.prng_seed(seed_ref[0], pl.program_id(0))
    x = x_ref[...].astype(jnp.float32)
    u = _uniform_from_bits(x.shape)
    g = -jnp.log(-jnp.log(u))  # Gumbel(0, 1)
    o_ref[...] = _train_math(x, g, tau, hard).astype(o_ref.dtype)


def _train_kernel_noise(x_ref, g_ref, o_ref, *, tau, hard):
    """training=True, portable fallback: Gumbel noise streamed from HBM."""
    x = x_ref[...].astype(jnp.float32)
    g = g_ref[...].astype(jnp.float32)
    o_ref[...] = _train_math(x, g, tau, hard).astype(o_ref.dtype)


def _eval_kernel(x_ref, o_ref):
    """training=False: one_hot(argmax(x, -1)).float()."""
    x = x_ref[...].astype(jnp.float32)
    o_ref[...] = _onehot_first_argmax(x, x.shape[-1]).astype(o_ref.dtype)


# ---------------------------------------------------------------------------
# tiling
# ---------------------------------------------------------------------------

def _round_up(n, m):
    return -(-n // m) * m


def _pick_block_rows(R, C, bytes_per_row, *, vmem_budget_bytes=10 << 20,
                     max_rows=32768, min_grid_steps=4):
    """Row-block size for the 1-D row grid.

    bytes_per_row = C * sum(itemsize of every tiled operand).
    Live VMEM is 2x (double buffering) * bytes_per_row * block_rows; keep that
    under ~10 MiB so it fits v5e's scoped VMEM with margin, while per-operand
    tiles land in the 2-4 MiB range (85%+ of HBM roofline).  Also keep the
    grid at >= min_grid_steps steps so v7x's two TensorCores both get work.
    """
    by_vmem = vmem_budget_bytes // max(2 * bytes_per_row, 1)
    br = min(by_vmem,
             max_rows,
             _round_up(pl.cdiv(R, min_grid_steps), 8),
             _round_up(R, 8))
    br = max(8, (br // 8) * 8)  # multiple of 8 sublanes
    return int(br)


# ---------------------------------------------------------------------------
# wrapper
# ---------------------------------------------------------------------------

def gumbel_softmax_forward(x, *, key=None, dim=-1, hard=True, tau=1.0,
                           training=True, block_rows=None):
    """Forward pass of GumbelSoftmax(dim=-1, hard=hard)."""
    assert dim == -1 or dim == x.ndim - 1, "kernel assumes class dim is last"
    orig_shape = x.shape
    C = orig_shape[-1]
    x2 = x.reshape(-1, C)  # free reshape; native dtype (cast happens in-kernel)
    R = x2.shape[0]

    # torch: gumbel_softmax keeps x.dtype; eval path does .float()
    out_dtype = x.dtype if training else jnp.float32
    out_shape = jax.ShapeDtypeStruct((R, C), out_dtype)

    cparams = pltpu.CompilerParams(
        dimension_semantics=("parallel",),
        vmem_limit_bytes=32 << 20,
    )

    if not training:
        bpr = C * (x2.dtype.itemsize + jnp.dtype(out_dtype).itemsize)
        br = block_rows or _pick_block_rows(R, C, bpr)
        out = pl.pallas_call(
            _eval_kernel,
            out_shape=out_shape,
            grid=(pl.cdiv(R, br),),
            in_specs=[pl.BlockSpec((br, C), lambda i: (i, 0))],
            out_specs=pl.BlockSpec((br, C), lambda i: (i, 0)),
            compiler_params=cparams,
        )(x2)
        return out.reshape(orig_shape)

    assert key is not None, "training path needs a PRNG key for gumbel noise"

    if jax.default_backend() == "tpu":
        # On-chip PRNG: no extra HBM stream for the noise.
        bpr = C * (x2.dtype.itemsize + jnp.dtype(out_dtype).itemsize)
        br = block_rows or _pick_block_rows(R, C, bpr)
        seed = jax.random.randint(key, (1,), 0, jnp.iinfo(jnp.int32).max,
                                  dtype=jnp.int32)
        out = pl.pallas_call(
            functools.partial(_train_kernel_tpu, tau=float(tau), hard=hard),
            out_shape=out_shape,
            grid_spec=pltpu.PrefetchScalarGridSpec(
                num_scalar_prefetch=1,
                grid=(pl.cdiv(R, br),),
                in_specs=[pl.BlockSpec((br, C), lambda i, seed: (i, 0))],
                out_specs=pl.BlockSpec((br, C), lambda i, seed: (i, 0)),
            ),
            compiler_params=cparams,
        )(seed, x2)
    else:
        # Portable fallback (CPU / interpret): stream host-generated noise.
        g = jax.random.gumbel(key, (R, C), dtype=jnp.float32)
        bpr = C * (x2.dtype.itemsize + 4 + jnp.dtype(out_dtype).itemsize)
        br = block_rows or _pick_block_rows(R, C, bpr)
        out = pl.pallas_call(
            functools.partial(_train_kernel_noise, tau=float(tau), hard=hard),
            out_shape=out_shape,
            grid=(pl.cdiv(R, br),),
            in_specs=[pl.BlockSpec((br, C), lambda i: (i, 0)),
                      pl.BlockSpec((br, C), lambda i: (i, 0))],
            out_specs=pl.BlockSpec((br, C), lambda i: (i, 0)),
            compiler_params=cparams,
        )(x2, g)
    return out.reshape(orig_shape)


# ---------------------------------------------------------------------------
# self-test
# ---------------------------------------------------------------------------

if __name__ == "__main__":
    key = jax.random.PRNGKey(0)
    kx, kg = jax.random.split(key)

    # small shape: batch=2, seq=8, classes=32 (class dim last, as dim=-1 requires)
    x = jax.random.normal(kx, (2, 8, 32), dtype=jnp.float32)

    # training path (module default: hard=True, tau=1.0)
    y_train = gumbel_softmax_forward(x, key=kg, hard=True, tau=1.0, training=True)
    # training path, hard=False (plain gumbel-softmax)
    y_soft = gumbel_softmax_forward(x, key=kg, hard=False, tau=1.0, training=True)
    # eval path: one_hot(argmax(x, -1)).float()
    y_eval = gumbel_softmax_forward(x, training=False)
    jax.block_until_ready((y_train, y_soft, y_eval))

    # sanity checks
    assert y_train.shape == x.shape and y_soft.shape == x.shape and y_eval.shape == x.shape
    # hard training output: exact one-hot rows
    assert jnp.array_equal(jnp.sum(y_train, axis=-1), jnp.ones(x.shape[:-1]))
    assert jnp.array_equal(jnp.max(y_train, axis=-1), jnp.ones(x.shape[:-1]))
    # soft training output: rows sum to ~1 (exact divide)
    assert jnp.allclose(jnp.sum(y_soft, axis=-1), 1.0, atol=1e-3)
    # eval output matches jax.nn reference exactly
    ref_eval = jax.nn.one_hot(jnp.argmax(x, axis=-1), x.shape[-1], dtype=jnp.float32)
    assert jnp.array_equal(y_eval, ref_eval)

    print("KERNEL_OK")
</pallas_src>

<mosaic_0001>
module attributes {stable_mosaic.version = 11 : i64} {
  func.func @_train_kernel_noise(%arg0: i32, %arg1: memref<8x32xf32, #tpu.memory_space<vmem>>, %arg2: memref<8x32xf32, #tpu.memory_space<vmem>>, %arg3: memref<8x32xf32, #tpu.memory_space<vmem>>) attributes {dimension_semantics = [#tpu.dimension_semantics<parallel>], iteration_bounds = array<i64: 2>, scalar_prefetch = 0 : i64, scratch_operands = 0 : i64, tpu.core_type = #tpu.core_type<tc>, window_params = [{transform_indices = @transform_0, window_bounds = array<i64: 8, 32>}, {transform_indices = @transform_1, window_bounds = array<i64: 8, 32>}, {transform_indices = @transform_2, window_bounds = array<i64: 8, 32>}]} {
    %c0 = arith.constant 0 : index
    %c0_0 = arith.constant 0 : index
    %0 = vector.load %arg1[%c0, %c0_0] : memref<8x32xf32, #tpu.memory_space<vmem>>, vector<8x32xf32>
    %c0_1 = arith.constant 0 : index
    %c0_2 = arith.constant 0 : index
    %1 = vector.load %arg2[%c0_1, %c0_2] : memref<8x32xf32, #tpu.memory_space<vmem>>, vector<8x32xf32>
    %2 = arith.addf %0, %1 : vector<8x32xf32>
    %3 = tpu.iota {dimensions = array<i32: 1>} : vector<8x32xi32>
    %cst = arith.constant dense<0xFF800000> : vector<8xf32>
    %4 = vector.multi_reduction <maximumf>, %2, %cst [1] : vector<8x32xf32> to vector<8xf32>
    %5 = vector.shape_cast %4 : vector<8xf32> to vector<8x1xf32>
    %6 = vector.broadcast %5 : vector<8x1xf32> to vector<8x32xf32>
    %7 = arith.cmpf oeq, %2, %6 : vector<8x32xf32>
    %c32_i32 = arith.constant 32 : i32
    %8 = vector.broadcast %c32_i32 : i32 to vector<8x32xi32>
    %9 = arith.select %7, %3, %8 : vector<8x32xi1>, vector<8x32xi32>
    %cst_3 = arith.constant dense<2147483647> : vector<8xi32>
    %10 = vector.multi_reduction <minsi>, %9, %cst_3 [1] : vector<8x32xi32> to vector<8xi32>
    %11 = vector.shape_cast %10 : vector<8xi32> to vector<8x1xi32>
    %12 = vector.broadcast %11 : vector<8x1xi32> to vector<8x32xi32>
    %13 = arith.cmpi eq, %3, %12 : vector<8x32xi32>
    %14 = arith.extui %13 : vector<8x32xi1> to vector<8x32xi32>
    %15 = arith.sitofp %14 : vector<8x32xi32> to vector<8x32xf32>
    %c0_4 = arith.constant 0 : index
    %c0_5 = arith.constant 0 : index
    %16 = vector.load %arg3[%c0_4, %c0_5] : memref<8x32xf32, #tpu.memory_space<vmem>>, vector<8x32xf32>
    tpu.vector_store %arg3[%c0_4, %c0_5], %15 {strides = array<i32>} : memref<8x32xf32, #tpu.memory_space<vmem>>, vector<8x32xf32>,
    return
  }
  func.func @transform_0(%arg0: i32) -> (i32, i32) {
    %c0_i32 = arith.constant 0 : i32
    %c0_i32_0 = arith.constant 0 : i32
    return %arg0, %c0_i32 : i32, i32
  }
  func.func @transform_1(%arg0: i32) -> (i32, i32) {
    %c0_i32 = arith.constant 0 : i32
    %c0_i32_0 = arith.constant 0 : i32
    return %arg0, %c0_i32 : i32, i32
  }
  func.func @transform_2(%arg0: i32) -> (i32, i32) {
    %c0_i32 = arith.constant 0 : i32
    %c0_i32_0 = arith.constant 0 : i32
    return %arg0, %c0_i32 : i32, i32
  }
}

</mosaic_0001>

<llo_original>
// kernel: tpu_custom_call.1
$region0: #{tpu_custom_call.1}
  #allocation0 [shape = 'u32[]', space=smem, size = 0x4, offset = 0x4, fixed_abs, tag = 'smem constant byte address 0x4 - core index']
  #allocation1 [shape = 'u32[144,128]{1,0:T(1,128)}', space=vmem, size = 0x12000, scoped, tag = 'internal scratch']
  %s0 = inlined_call_operand.hbm [shape: f32[16,32], index: 0, kind: input, shape index: {}]
  %s1 = inlined_call_operand.hbm [shape: f32[16,32], index: 1, kind: input, shape index: {}]
  %s2 = inlined_call_operand.hbm [shape: f32[16,32], index: 2, kind: output, shape index: {}]
  %s3 = sld [smem:[#allocation0]]
  $region49: #{tpu_custom_call.1} parent=0
    _
  %s5 = ssub.s32 1, %s3
  %s6 = scalar_select 0, %s5, %s3
  $region1: #{tpu_custom_call.1} parent=0
    #allocation2 [shape = 'u8[8192]{0}', space=vmem, size = 0x2000, scoped, tag = 'input window, operand 0']
    #allocation3 [shape = 's32[2]{0}', space=sflag, size = 0x8, scoped, tag = 'scoped memory for tpu_custom_call.1']
    #allocation4 [shape = 's32[2]{0}', space=sflag, size = 0x8, scoped, tag = 'scoped memory for tpu_custom_call.1']
    #allocation5 [shape = 'u8[8192]{0}', space=vmem, size = 0x2000, scoped, tag = 'input window, operand 1']
    #allocation6 [shape = 's32[2]{0}', space=sflag, size = 0x8, scoped, tag = 'scoped memory for tpu_custom_call.1']
    #allocation7 [shape = 'u8[8192]{0}', space=vmem, size = 0x2000, scoped, tag = 'output window, operand 0']
    %7 = vsyncpa [#allocation3], 0
    %s8 = scalar_lea.sflag [#allocation3], 1
    %9 = vsyncpa %s8, 0
    %10 = vsyncpa [#allocation6], 0
    %s11 = scalar_lea.sflag [#allocation6], 1
    %12 = vsyncpa %s11, 0
    %13 = vsyncpa [#allocation4], 0
    %s14 = scalar_lea.sflag [#allocation4], 1
    %15 = vsyncpa %s14, 0
    loop: start=0, step=1, limit=4
    $region2: #{tpu_custom_call.1} parent=1 // loop_pre_header
      _
    $region3: #{tpu_custom_call.1} parent=1 // loop_header
      %s17 = sphi 0, %s21
      %p18 = scmp.ge.s32.totalorder %s17, 4
      %s27 = sphi 0, %s29
      %s30 = sphi 0, %s27
      %s31 = sphi 0, %s30
      %s47 = sphi 0, %s31
      %s53 = sphi 0, %s55
      %s56 = sphi 0, %s53
      %s57 = sphi 0, %s56
      %s73 = sphi 0, %s57
      %s79 = sphi 0, %s81
      %s82 = sphi 0, %s79
      %s83 = sphi 0, %s82
      %s99 = sphi 0, %s83
    $region4: #{tpu_custom_call.1} parent=1 // loop_header_branch
      %20 = sbr.rel (%p18) target = $region8
    $region5: #{tpu_custom_call.1} parent=1 // loop_body
      %s22 = ssub.s32 %s17, 1
      %s23 = ssub.s32 %s17, 2
      %s24 = sadd.s32 %s17, 1
      %s25 = ssub.s32 %s17, %s24
      %p26 = scmp.eq.s32.totalorder %s25, 0
      %s28 = sadd.s32 %s27, 1
      %s29 = scalar_select %p26, %s27, %s28
      %p32 = pneg %p26
      %p33 = scmp.eq.s32.totalorder %s17, 1
      %p34 = por %p32, %p33
      %p35 = scmp.ne.s32.totalorder %s27, %s30
      %p36 = scmp.eq.s32.totalorder %s17, 0
      %p37 = por %p35, %p36
      %p38 = scmp.ne.s32.totalorder %s27, %s30
      %p39 = scmp.eq.s32.totalorder %s22, 1
      %p40 = por %p38, %p39
      %p41 = scmp.ne.s32.totalorder %s30, %s31
      %p42 = scmp.eq.s32.totalorder %s22, 0
      %p43 = por %p41, %p42
      %p44 = scmp.ne.s32.totalorder %s30, %s31
      %p45 = scmp.eq.s32.totalorder %s23, 1
      %p46 = por %p44, %p45
      %p48 = scmp.ne.s32.totalorder %s31, %s47
      %p49 = scmp.eq.s32.totalorder %s23, 0
      %p50 = por %p48, %p49
      %s51 = ssub.s32 %s17, %s24
      %p52 = scmp.eq.s32.totalorder %s51, 0
      %s54 = sadd.s32 %s53, 1
      %s55 = scalar_select %p52, %s53, %s54
      %p58 = pneg %p52
      %p59 = scmp.eq.s32.totalorder %s17, 1
      %p60 = por %p58, %p59
      %p61 = scmp.ne.s32.totalorder %s53, %s56
      %p62 = scmp.eq.s32.totalorder %s17, 0
      %p63 = por %p61, %p62
      %p64 = scmp.ne.s32.totalorder %s53, %s56
      %p65 = scmp.eq.s32.totalorder %s22, 1
      %p66 = por %p64, %p65
      %p67 = scmp.ne.s32.totalorder %s56, %s57
      %p68 = scmp.eq.s32.totalorder %s22, 0
      %p69 = por %p67, %p68
      %p70 = scmp.ne.s32.totalorder %s56, %s57
      %p71 = scmp.eq.s32.totalorder %s23, 1
      %p72 = por %p70, %p71
      %p74 = scmp.ne.s32.totalorder %s57, %s73
      %p75 = scmp.eq.s32.totalorder %s23, 0
      %p76 = por %p74, %p75
      %s77 = ssub.s32 %s17, %s24
      %p78 = scmp.eq.s32.totalorder %s77, 0
      %s80 = sadd.s32 %s79, 1
      %s81 = scalar_select %p78, %s79, %s80
      %p84 = pneg %p78
      %p85 = scmp.eq.s32.totalorder %s17, 1
      %p86 = por %p84, %p85
      %p87 = scmp.ne.s32.totalorder %s79, %s82
      %p88 = scmp.eq.s32.totalorder %s17, 0
      %p89 = por %p87, %p88
      %p90 = scmp.ne.s32.totalorder %s79, %s82
      %p91 = scmp.eq.s32.totalorder %s22, 1
      %p92 = por %p90, %p91
      %p93 = scmp.ne.s32.totalorder %s82, %s83
      %p94 = scmp.eq.s32.totalorder %s22, 0
      %p95 = por %p93, %p94
      %p96 = scmp.ne.s32.totalorder %s82, %s83
      %p97 = scmp.eq.s32.totalorder %s23, 1
      %p98 = por %p96, %p97
      %p100 = scmp.ne.s32.totalorder %s83, %s99
      %p101 = scmp.eq.s32.totalorder %s23, 0
      %p102 = por %p100, %p101
      %p103 = scmp.le.s32.totalorder 1, %s17
      %p104 = scmp.lt.s32.totalorder %s17, 3
      %p105 = pnand %p103, %p104
      %p106 = pneg %p105
      // Predicated region
      $region9: #{tpu_custom_call.1} parent=5 // pred_check
        _
      $region10: #{tpu_custom_call.1} parent=5 // pred_check_branch
        %108 = sbr.rel (%p105) target = $region12
      $region11: #{tpu_custom_call.1} parent=5 // pred_region
        %s109 = ssub.s32 %s17, 1
      $region12: #{tpu_custom_call.1} parent=5 // pred_fallthru
        _
      %p110 = scmp.lt.s32.totalorder %s17, 2
      // Predicated region
      $region13: #{tpu_custom_call.1} parent=5 // pred_check
        %p111 = pneg %p110
      $region14: #{tpu_custom_call.1} parent=5 // pred_check_branch
        %113 = sbr.rel (%p111) target = $region16
      $region15: #{tpu_custom_call.1} parent=5 // pred_region
        // Predicated region
        $region17: #{tpu_custom_call.1} parent=15 // pred_check
          %p114 = pneg %p37
        $region18: #{tpu_custom_call.1} parent=15 // pred_check_branch
          %116 = sbr.rel (%p114) target = $region20
        $region19: #{tpu_custom_call.1} parent=15 // pred_region
          %s117 = sand.u32 %s27, 1
          %s118 = scalar_lea.sflag [#allocation3], %s117
          %s119 = sand.u32 %s27, 1
          %s120 = smul.addr %s119, 8
          %s121 = scalar_lea.vmem [#allocation2], %s120
          %s123 = ssub.s32 128, 128
          %124 = vsyncadd %s118, %s123
          %s125 = smul.addr %s17, 128
          %s126 = scalar_lea.hbm %s0, %s125
          %s128 = sshll.u32 %s121, 4
          %s129 = int_to_ptr.vmem [resolvable:$true] %s128
          %131 = dma.hbm_to_vmem [thread:$0]  %s126, 128, %s129, %s118
        $region20: #{tpu_custom_call.1} parent=15 // pred_fallthru
          _
        // Predicated region
        $region21: #{tpu_custom_call.1} parent=15 // pred_check
          %p132 = pneg %p63
        $region22: #{tpu_custom_call.1} parent=15 // pred_check_branch
          %134 = sbr.rel (%p132) target = $region24
        $region23: #{tpu_custom_call.1} parent=15 // pred_region
          %s135 = sand.u32 %s53, 1
          %s136 = scalar_lea.sflag [#allocation6], %s135
          %s137 = sand.u32 %s53, 1
          %s138 = smul.addr %s137, 8
          %s139 = scalar_lea.vmem [#allocation5], %s138
          %s141 = ssub.s32 128, 128
          %142 = vsyncadd %s136, %s141
          %s143 = smul.addr %s17, 128
          %s144 = scalar_lea.hbm %s1, %s143
          %s146 = sshll.u32 %s139, 4
          %s147 = int_to_ptr.vmem [resolvable:$true] %s146
          %149 = dma.hbm_to_vmem [thread:$0]  %s144, 128, %s147, %s136
        $region24: #{tpu_custom_call.1} parent=15 // pred_fallthru
          _
      $region16: #{tpu_custom_call.1} parent=5 // pred_fallthru
        _
      %p150 = scmp.le.s32.totalorder 1, %s17
      %p151 = scmp.lt.s32.totalorder %s17, 3
      %p152 = pnand %p150, %p151
      %p153 = pneg %p152
      // Predicated region
      $region25: #{tpu_custom_call.1} parent=5 // pred_check
        _
      $region26: #{tpu_custom_call.1} parent=5 // pred_check_branch
        %155 = sbr.rel (%p152) target = $region28
      $region27: #{tpu_custom_call.1} parent=5 // pred_region
        %s156 = ssub.s32 %s17, 1
        %s157 = sand.u32 %s30, 1
        %s158 = scalar_lea.sflag [#allocation3], %s157
        %s159 = sand.u32 %s30, 1
        %s160 = smul.addr %s159, 8
        %s161 = scalar_lea.vmem [#allocation2], %s160
        // Predicated region
        $region29: #{tpu_custom_call.1} parent=27 // pred_check
          %p162 = pneg %p43
        $region30: #{tpu_custom_call.1} parent=27 // pred_check_branch
          %164 = sbr.rel (%p162) target = $region32
        $region31: #{tpu_custom_call.1} parent=27 // pred_region
          %165 = dma.done %s158, 128
        $region32: #{tpu_custom_call.1} parent=27 // pred_fallthru
          _
        %s166 = sand.u32 %s56, 1
        %s167 = scalar_lea.sflag [#allocation6], %s166
        %s168 = sand.u32 %s56, 1
        %s169 = smul.addr %s168, 8
        %s170 = scalar_lea.vmem [#allocation5], %s169
        // Predicated region
        $region33: #{tpu_custom_call.1} parent=27 // pred_check
          %p171 = pneg %p69
        $region34: #{tpu_custom_call.1} parent=27 // pred_check_branch
          %173 = sbr.rel (%p171) target = $region36
        $region35: #{tpu_custom_call.1} parent=27 // pred_region
          %174 = dma.done %s167, 128
        $region36: #{tpu_custom_call.1} parent=27 // pred_fallthru
          _
        %s175 = sand.u32 %s30, 1
        %s176 = scalar_lea.sflag [#allocation3], %s175
        %s177 = sand.u32 %s30, 1
        %s178 = smul.addr %s177, 8
        %s179 = scalar_lea.vmem [#allocation2], %s178
        %p180 = pneg %p43
        %p181 = pneg %p40
        %s182 = sand.u32 %s56, 1
        %s183 = scalar_lea.sflag [#allocation6], %s182
        %s184 = sand.u32 %s56, 1
        %s185 = smul.addr %s184, 8
        %s186 = scalar_lea.vmem [#allocation5], %s185
        %p187 = pneg %p69
        %p188 = pneg %p66
        %p189 = pneg %p95
        %p190 = pneg %p92
        %s191 = sand.u32 %s82, 1
        %s192 = scalar_lea.sflag [#allocation4], %s191
        %s193 = sand.u32 %s82, 1
        %s194 = smul.addr %s193, 8
        %s195 = scalar_lea.vmem [#allocation7], %s194
        %v196 = vld [vmem:[%s161] sm:$0xff]
        %v197 = vld [vmem:[%s170] sm:$0xff]
        %v198 = vadd.f32 %v196, %v197
        %v199 = vlaneseq
        %v200 = vand.u32 %v199, 127
        %vm201 = vcmask 261120
        %v202 = vsel %vm201, %v198, -inf
        %203 = vmax.xlane.f32.xlu0 %v202
        %v204 = vpop.xlane.xlu0 %203
        %vm205 = vcmp.eq.f32.partialorder %v198, %v204
        %v206 = vsel %vm205, %v200, 32
        %v207 = vsel %vm201, %v206, 2147483647
        %v208 = vand.u32 %v207, 65535
        %v209 = vshra.s32 %v207, 16
        %v210 = vcvt.s32.f32 %v208
        %v211 = vcvt.s32.f32 %v209
        %212 = vmin.xlane.f32.xlu0 %v211
        %v213 = vpop.xlane.xlu0 %212
        %vm214 = vcmp.eq.f32.partialorder %v211, %v213
        %v215 = vsel %vm214, %v210, inf
        %216 = vmin.xlane.f32.xlu0 %v215
        %v217 = vpop.xlane.xlu0 %216
        %v218 = vcvt.f32.s32 %v217
        %v219 = vcvt.f32.s32 %v213
        %v220 = vshll.u32 %v219, 16
        %v221 = vadd.s32 %v220, %v218
        %vm222 = vcmp.eq.s32.totalorder %v200, %v221
        %v223 = vsel %vm222, 1, 0
        %v224 = vcvt.s32.f32 %v223
        %225 = vst.msk [vmem:[%s195] sm:$0xff] %vm201, %v224
        %s226 = sand.u32 %s82, 1
        %s227 = scalar_lea.sflag [#allocation4], %s226
        %s228 = sand.u32 %s82, 1
        %s229 = smul.addr %s228, 8
        %s230 = scalar_lea.vmem [#allocation7], %s229
        // Predicated region
        $region37: #{tpu_custom_call.1} parent=27 // pred_check
          %p231 = pneg %p92
        $region38: #{tpu_custom_call.1} parent=27 // pred_check_branch
          %233 = sbr.rel (%p231) target = $region40
        $region39: #{tpu_custom_call.1} parent=27 // pred_region
          %s235 = ssub.s32 128, 128
          %236 = vsyncadd %s227, %s235
          %s237 = smul.addr %s22, 128
          %s238 = scalar_lea.hbm %s2, %s237
          %s240 = sshll.u32 %s230, 4
          %s241 = int_to_ptr.vmem [resolvable:$true] %s240
          %243 = dma.vmem_to_hbm [thread:$0]  %s241, 128, %s238, %s227
        $region40: #{tpu_custom_call.1} parent=27 // pred_fallthru
          _
      $region28: #{tpu_custom_call.1} parent=5 // pred_fallthru
        _
      %p244 = scmp.le.s32.totalorder 2, %s17
      // Predicated region
      $region41: #{tpu_custom_call.1} parent=5 // pred_check
        %p245 = pneg %p244
      $region42: #{tpu_custom_call.1} parent=5 // pred_check_branch
        %247 = sbr.rel (%p245) target = $region44
      $region43: #{tpu_custom_call.1} parent=5 // pred_region
        %s248 = ssub.s32 %s17, 2
        // Predicated region
        $region45: #{tpu_custom_call.1} parent=43 // pred_check
          %p249 = pneg %p98
        $region46: #{tpu_custom_call.1} parent=43 // pred_check_branch
          %251 = sbr.rel (%p249) target = $region48
        $region47: #{tpu_custom_call.1} parent=43 // pred_region
          %s252 = sand.u32 %s83, 1
          %s253 = scalar_lea.sflag [#allocation4], %s252
          %s254 = sand.u32 %s83, 1
          %s255 = smul.addr %s254, 8
          %s256 = scalar_lea.vmem [#allocation7], %s255
          %257 = dma.done %s253, 128
        $region48: #{tpu_custom_call.1} parent=43 // pred_fallthru
          _
      $region44: #{tpu_custom_call.1} parent=5 // pred_fallthru
        _
    $region6: #{tpu_custom_call.1} parent=1 // loop_footer
      %s21 = sadd.s32 1, %s17
    $region7: #{tpu_custom_call.1} parent=1 // loop_footer_branch
      %16 = sbr.rel target = $region3
    $region8: #{tpu_custom_call.1} parent=1 // loop_exit
      _
    %258 = vsyncpa [#allocation3], 1
    %s259 = scalar_lea.sflag [#allocation3], 1
    %260 = vsyncpa %s259, 1
    %261 = vsyncpa [#allocation6], 1
    %s262 = scalar_lea.sflag [#allocation6], 1
    %263 = vsyncpa %s262, 1
    %264 = vsyncpa [#allocation4], 1
    %s265 = scalar_lea.sflag [#allocation4], 1
    %266 = vsyncpa %s265, 1

</llo_original>
